<compile_context>
chip_gen: v7x
topology: tpu7x:2x2x1
jax: 0.10.0
libtpu: 0.0.40
codegen_flags: <defaults>
</compile_context>

<pallas_src>
import functools

import jax
import jax.numpy as jnp
from jax.experimental import pallas as pl
from jax.experimental.pallas import tpu as pltpu


def _round_up(n, m):
    return ((n + m - 1) // m) * m


def _pick_tiles(B, S, H, x_itemsize):
    """Pick (batch block, sequence tile, needs_ragged_mask).

    b_blk: full B when small (<=8) else 8 (sublane-aligned; gives the leading
    'parallel' grid axis something to shard across v7x's 2 TensorCores).
    ts: sized so the double-buffered native-dtype x block stays within a
    ~8 MiB VMEM budget, capped at 512 rows (large-tile / ~85%-of-roofline
    regime), stepped so b_blk*ts is a multiple of 256 when b_blk==8 (v6e/v7x
    256x256 MXU fill).  Prefers a divisor of S (maskless); otherwise the
    ragged last tile is masked in-kernel (no wrapper pad pass over x).
    """
    b_blk = B if B <= 8 else 8
    step = 32 if b_blk >= 8 else 16
    per_buf_budget = 4 << 20                       # x double-buffer ~<= 8 MiB
    max_ts = max(step, per_buf_budget // max(1, b_blk * H * x_itemsize))
    cap = min(S, 512, max_ts)
    if cap >= S:
        return b_blk, S, False                     # whole (short) sequence
    ts = max(step, (cap // step) * step)
    for cand in range(ts, step - 1, -step):        # maskless path if possible
        if S % cand == 0:
            return b_blk, cand, False
    return b_blk, ts, True                         # masked ragged last tile


def _model_kernel(x_ref, w1_ref, b1_ref, wc_ref, bc_ref, logits_ref, acc_ref,
                  *, seq_len, needs_mask):
    """One (batch-block, sequence-tile) step of
        logits = (sum_s tanh(x @ W1 + b1)) @ (Wc / S) + bc.

    x_ref:      (b_blk, ts, H)  f32  VMEM  current seq tile (native dtype)
    w1_ref:     (H, Hp)         bf16 VMEM  (output cols zero-padded to Hp)
    b1_ref:     (1, Hp)         f32  VMEM
    wc_ref:     (Hp, Cp)        f32  VMEM  (1/S already folded in)
    bc_ref:     (1, Cp)         f32  VMEM
    logits_ref: (b_blk, Cp)     f32  VMEM  output (written on last seq step)
    acc_ref:    (b_blk, Hp)     f32  VMEM  pooled-sum accumulator scratch
    """
    si = pl.program_id(1)

    @pl.when(si == 0)
    def _init():
        acc_ref[...] = jnp.zeros_like(acc_ref)

    b_blk, ts, h_in = x_ref.shape
    # Flatten (b_blk, ts) rows -> one 2-D MXU matmul; cast MXU operand to bf16
    # in-kernel (2x MXU throughput, f32 accumulation; VPU/EUP math stays f32).
    x2 = x_ref[...].reshape(b_blk * ts, h_in).astype(jnp.bfloat16)
    h = jnp.dot(x2, w1_ref[...],
                preferred_element_type=jnp.float32)           # f32 (M, Hp)
    # TODO(synk): on v6e/v7x a bf16 tanh would double EUP throughput if it
    # ever binds; kept f32 for v5e compatibility (no bf16 EUP/VPU).
    h = jnp.tanh(h + b1_ref[...])                             # VPU + EUP
    h3 = h.reshape(b_blk, ts, h.shape[-1])
    if needs_mask:
        # Ragged last sequence tile: zero rows past the real sequence length
        # (out-of-bounds block rows are unspecified -> must be masked).
        pos = jax.lax.broadcasted_iota(jnp.int32, h3.shape, 1) + si * ts
        h3 = jnp.where(pos < seq_len, h3, 0.0)
    # Partial sequence sum (mean's 1/S folded into Wc); XLU sublane reduction
    # rides a free slot alongside the MXU work.
    acc_ref[...] += h3.sum(axis=1)                            # f32 (b_blk, Hp)

    @pl.when(si == pl.num_programs(1) - 1)
    def _finalize():
        # Tiny classification head; f32 for accuracy (negligible cost).
        logits = jnp.dot(acc_ref[...], wc_ref[...],
                         preferred_element_type=jnp.float32) + bc_ref[...]
        logits_ref[...] = logits.astype(logits_ref.dtype)     # lane-dense vst


def wrapped_model_forward(x, w1, b1, wc, bc):
    """JAX analogue of WrappedModel.forward: run the synthetic model (one
    Pallas kernel) and return only the 'logits' tensor."""
    B, S, H = x.shape
    C = wc.shape[1]
    Hp = _round_up(H, 128)          # lane-dense hidden width (weights only)
    Cp = _round_up(C, 128)          # lane-dense logits (unmasked stores)
    b_blk, ts, needs_mask = _pick_tiles(B, S, H, x.dtype.itemsize)
    n_b = pl.cdiv(B, b_blk)
    n_s = pl.cdiv(S, ts)

    # Only the tiny, VMEM-resident weights are padded / pre-cast; x goes into
    # the kernel in its native dtype & shape so the kernel's own DMA is the
    # only HBM pass over the activations.  Zero padding is exact: zero W1
    # columns + zero b1 pad -> tanh(0) = 0, which meets zero-padded Wc rows.
    w1_p = jnp.pad(w1, ((0, 0), (0, Hp - H))).astype(jnp.bfloat16)      # (H, Hp)
    b1_p = jnp.pad(b1.astype(jnp.float32), ((0, 0), (0, Hp - H)))       # (1, Hp)
    # Fold the 1/S of the sequence mean into the classifier weight.
    wc_p = jnp.pad((wc / S).astype(jnp.float32), ((0, Hp - H), (0, Cp - C)))
    bc_p = jnp.pad(bc.astype(jnp.float32), ((0, 0), (0, Cp - C)))

    # Explicit VMEM budget: double-buffered x block + resident weights + acc
    # + output, with headroom; capped at 48 MiB (valid on v7x's 64 MiB VMEM,
    # raises v5e's 16 MiB default when large tiles need it).
    xblk_bytes = b_blk * ts * H * x.dtype.itemsize
    w_bytes = (w1_p.size * 2 + b1_p.size * 4 + wc_p.size * 4 + bc_p.size * 4)
    vmem_need = (2 * xblk_bytes + 2 * w_bytes
                 + 2 * b_blk * Cp * 4 + b_blk * Hp * 4)
    vmem_limit = int(min(max(vmem_need * 3 // 2, 32 << 20), 48 << 20))

    cost = pl.CostEstimate(
        flops=2 * B * S * H * Hp + 2 * B * Hp * Cp,
        transcendentals=B * S * Hp,
        bytes_accessed=(x.size * x.dtype.itemsize + w_bytes + B * Cp * 4),
    )

    kernel = functools.partial(_model_kernel, seq_len=S, needs_mask=needs_mask)

    logits_p = pl.pallas_call(
        kernel,
        out_shape=jax.ShapeDtypeStruct((B, Cp), jnp.float32),
        grid_spec=pl.GridSpec(
            # Leading "parallel" batch axis (v7x megacore shards it), trailing
            # "arbitrary" sequence-reduction axis with a resident accumulator.
            grid=(n_b, n_s),
            in_specs=[
                pl.BlockSpec((b_blk, ts, H), lambda b, s: (b, s, 0)),
                pl.BlockSpec((H, Hp), lambda b, s: (0, 0)),
                pl.BlockSpec((1, Hp), lambda b, s: (0, 0)),
                pl.BlockSpec((Hp, Cp), lambda b, s: (0, 0)),
                pl.BlockSpec((1, Cp), lambda b, s: (0, 0)),
            ],
            out_specs=pl.BlockSpec((b_blk, Cp), lambda b, s: (b, 0)),
            scratch_shapes=[pltpu.VMEM((b_blk, Hp), jnp.float32)],
        ),
        compiler_params=pltpu.CompilerParams(
            dimension_semantics=("parallel", "arbitrary"),
            vmem_limit_bytes=vmem_limit),
        cost_estimate=cost,
    )(x, w1_p, b1_p, wc_p, bc_p)

    # Slice the lane-padded logits back to (B, num_labels) == outputs['logits'].
    return logits_p[:, :C]


if __name__ == "__main__":
    # Small shapes implied by an NLP classification forward.
    B, S, H, C = 2, 8, 32, 4

    key = jax.random.PRNGKey(0)
    k_x, k_w1, k_b1, k_wc, k_bc = jax.random.split(key, 5)

    # Deterministic synthetic parameters (no checkpoint loading).
    x = jax.random.normal(k_x, (B, S, H), dtype=jnp.float32)
    w1 = jax.random.normal(k_w1, (H, H), dtype=jnp.float32) * 0.1
    b1 = jax.random.normal(k_b1, (1, H), dtype=jnp.float32) * 0.1
    wc = jax.random.normal(k_wc, (H, C), dtype=jnp.float32) * 0.1
    bc = jax.random.normal(k_bc, (1, C), dtype=jnp.float32) * 0.1

    logits = wrapped_model_forward(x, w1, b1, wc, bc)
    jax.block_until_ready(logits)

    # Pure-JAX f32 reference of the same synthetic model (WrappedModel returns
    # only 'logits').  Tolerance covers intentional bf16 rounding of the MXU
    # operands (x, W1) inside the kernel.
    h_ref = jnp.tanh(jnp.einsum("bsh,hk->bsk", x, w1) + b1[None, :, :])
    ref = jnp.mean(h_ref, axis=1) @ wc + bc
    assert logits.shape == (B, C)
    assert jnp.allclose(logits, ref, atol=1e-2, rtol=1e-2), (
        float(jnp.max(jnp.abs(logits - ref))))

    print("KERNEL_OK")
</pallas_src>

<mosaic_0001>
module attributes {stable_mosaic.version = 11 : i64} {
  func.func @_model_kernel(%arg0: i32, %arg1: i32, %arg2: memref<2x8x32xf32, #tpu.memory_space<vmem>>, %arg3: memref<32x128xbf16, #tpu.memory_space<vmem>>, %arg4: memref<1x128xf32, #tpu.memory_space<vmem>>, %arg5: memref<128x128xf32, #tpu.memory_space<vmem>>, %arg6: memref<1x128xf32, #tpu.memory_space<vmem>>, %arg7: memref<2x128xf32, #tpu.memory_space<vmem>>, %arg8: memref<2x128xf32, #tpu.memory_space<vmem>>) attributes {dimension_semantics = [#tpu.dimension_semantics<parallel>, #tpu.dimension_semantics<arbitrary>], iteration_bounds = array<i64: 1, 1>, scalar_prefetch = 0 : i64, scratch_operands = 1 : i64, tpu.core_type = #tpu.core_type<tc>, window_params = [{transform_indices = @transform_0, window_bounds = array<i64: 2, 8, 32>}, {pipeline_mode = #tpu.pipeline_mode<synchronous>, transform_indices = @transform_1, window_bounds = array<i64: 32, 128>}, {pipeline_mode = #tpu.pipeline_mode<synchronous>, transform_indices = @transform_2, window_bounds = array<i64: 1, 128>}, {pipeline_mode = #tpu.pipeline_mode<synchronous>, transform_indices = @transform_3, window_bounds = array<i64: 128, 128>}, {pipeline_mode = #tpu.pipeline_mode<synchronous>, transform_indices = @transform_4, window_bounds = array<i64: 1, 128>}, {transform_indices = @transform_5, window_bounds = array<i64: 2, 128>}]} {
    %c0_i32 = arith.constant 0 : i32
    %0 = arith.cmpi eq, %arg1, %c0_i32 : i32
    %1 = arith.extui %0 : i1 to i32
    %c0_i32_0 = arith.constant 0 : i32
    %2 = arith.cmpi ne, %1, %c0_i32_0 : i32
    scf.if %2 {
      %cst_14 = arith.constant 0.000000e+00 : f32
      %20 = vector.broadcast %cst_14 : f32 to vector<2x128xf32>
      %c0_15 = arith.constant 0 : index
      %c0_16 = arith.constant 0 : index
      %21 = vector.load %arg8[%c0_15, %c0_16] : memref<2x128xf32, #tpu.memory_space<vmem>>, vector<2x128xf32>
      tpu.vector_store %arg8[%c0_15, %c0_16], %20 {strides = array<i32>} : memref<2x128xf32, #tpu.memory_space<vmem>>, vector<2x128xf32>,
    } else {
    }
    %c0 = arith.constant 0 : index
    %c0_1 = arith.constant 0 : index
    %c0_2 = arith.constant 0 : index
    %3 = vector.load %arg2[%c0, %c0_1, %c0_2] : memref<2x8x32xf32, #tpu.memory_space<vmem>>, vector<2x8x32xf32>
    %4 = vector.shape_cast %3 : vector<2x8x32xf32> to vector<16x32xf32>
    %5 = arith.truncf %4 : vector<16x32xf32> to vector<16x32xbf16>
    %c0_3 = arith.constant 0 : index
    %c0_4 = arith.constant 0 : index
    %6 = vector.load %arg3[%c0_3, %c0_4] : memref<32x128xbf16, #tpu.memory_space<vmem>>, vector<32x128xbf16>
    %cst = arith.constant dense<0.000000e+00> : vector<16x128xf32>
    %7 = tpu.matmul %5, %6, %cst {dimension_numbers = #tpu.dot_dimension_numbers<[1], [0], [0], [1], [0, 0, 1, 1], [], []>} : vector<16x32xbf16>, vector<32x128xbf16>, vector<16x128xf32> -> vector<16x128xf32>
    %c0_5 = arith.constant 0 : index
    %c0_6 = arith.constant 0 : index
    %8 = vector.load %arg4[%c0_5, %c0_6] : memref<1x128xf32, #tpu.memory_space<vmem>>, vector<1x128xf32>
    %9 = vector.broadcast %8 : vector<1x128xf32> to vector<16x128xf32>
    %10 = arith.addf %7, %9 : vector<16x128xf32>
    %11 = math.tanh %10 : vector<16x128xf32>
    %12 = vector.shape_cast %11 : vector<16x128xf32> to vector<2x8x128xf32>
    %c0_7 = arith.constant 0 : index
    %c0_8 = arith.constant 0 : index
    %13 = vector.load %arg8[%c0_7, %c0_8] : memref<2x128xf32, #tpu.memory_space<vmem>>, vector<2x128xf32>
    %cst_9 = arith.constant dense<0.000000e+00> : vector<2x128xf32>
    %14 = vector.multi_reduction <add>, %12, %cst_9 [1] : vector<2x8x128xf32> to vector<2x128xf32>
    %15 = arith.addf %13, %14 : vector<2x128xf32>
    %c0_10 = arith.constant 0 : index
    %c0_11 = arith.constant 0 : index
    %16 = vector.load %arg8[%c0_10, %c0_11] : memref<2x128xf32, #tpu.memory_space<vmem>>, vector<2x128xf32>
    tpu.vector_store %arg8[%c0_10, %c0_11], %15 {strides = array<i32>} : memref<2x128xf32, #tpu.memory_space<vmem>>, vector<2x128xf32>,
    %c0_i32_12 = arith.constant 0 : i32
    %17 = arith.cmpi eq, %arg1, %c0_i32_12 : i32
    %18 = arith.extui %17 : i1 to i32
    %c0_i32_13 = arith.constant 0 : i32
    %19 = arith.cmpi ne, %18, %c0_i32_13 : i32
    scf.if %19 {
      %c0_14 = arith.constant 0 : index
      %c0_15 = arith.constant 0 : index
      %20 = vector.load %arg8[%c0_14, %c0_15] : memref<2x128xf32, #tpu.memory_space<vmem>>, vector<2x128xf32>
      %c0_16 = arith.constant 0 : index
      %c0_17 = arith.constant 0 : index
      %21 = vector.load %arg5[%c0_16, %c0_17] : memref<128x128xf32, #tpu.memory_space<vmem>>, vector<128x128xf32>
      %cst_18 = arith.constant dense<0.000000e+00> : vector<2x128xf32>
      %22 = tpu.matmul %20, %21, %cst_18 {dimension_numbers = #tpu.dot_dimension_numbers<[1], [0], [0], [1], [0, 0, 1, 1], [], []>} : vector<2x128xf32>, vector<128x128xf32>, vector<2x128xf32> -> vector<2x128xf32>
      %c0_19 = arith.constant 0 : index
      %c0_20 = arith.constant 0 : index
      %23 = vector.load %arg6[%c0_19, %c0_20] : memref<1x128xf32, #tpu.memory_space<vmem>>, vector<1x128xf32>
      %24 = vector.broadcast %23 : vector<1x128xf32> to vector<2x128xf32>
      %25 = arith.addf %22, %24 : vector<2x128xf32>
      %c0_21 = arith.constant 0 : index
      %c0_22 = arith.constant 0 : index
      %26 = vector.load %arg7[%c0_21, %c0_22] : memref<2x128xf32, #tpu.memory_space<vmem>>, vector<2x128xf32>
      tpu.vector_store %arg7[%c0_21, %c0_22], %25 {strides = array<i32>} : memref<2x128xf32, #tpu.memory_space<vmem>>, vector<2x128xf32>,
    } else {
    }
    return
  }
  func.func @transform_0(%arg0: i32, %arg1: i32) -> (i32, i32, i32) {
    %c0_i32 = arith.constant 0 : i32
    %c0_i32_0 = arith.constant 0 : i32
    return %arg0, %arg1, %c0_i32 : i32, i32, i32
  }
  func.func @transform_1(%arg0: i32, %arg1: i32) -> (i32, i32) {
    %c0_i32 = arith.constant 0 : i32
    %c0_i32_0 = arith.constant 0 : i32
    %c0_i32_1 = arith.constant 0 : i32
    return %c0_i32, %c0_i32_0 : i32, i32
  }
  func.func @transform_2(%arg0: i32, %arg1: i32) -> (i32, i32) {
    %c0_i32 = arith.constant 0 : i32
    %c0_i32_0 = arith.constant 0 : i32
    %c0_i32_1 = arith.constant 0 : i32
    return %c0_i32, %c0_i32_0 : i32, i32
  }
  func.func @transform_3(%arg0: i32, %arg1: i32) -> (i32, i32) {
    %c0_i32 = arith.constant 0 : i32
    %c0_i32_0 = arith.constant 0 : i32
    %c0_i32_1 = arith.constant 0 : i32
    return %c0_i32, %c0_i32_0 : i32, i32
  }
  func.func @transform_4(%arg0: i32, %arg1: i32) -> (i32, i32) {
    %c0_i32 = arith.constant 0 : i32
    %c0_i32_0 = arith.constant 0 : i32
    %c0_i32_1 = arith.constant 0 : i32
    return %c0_i32, %c0_i32_0 : i32, i32
  }
  func.func @transform_5(%arg0: i32, %arg1: i32) -> (i32, i32) {
    %c0_i32 = arith.constant 0 : i32
    %c0_i32_0 = arith.constant 0 : i32
    return %arg0, %c0_i32 : i32, i32
  }
}

</mosaic_0001>

<llo_original>
// kernel: tpu_custom_call.1
$region0: #{tpu_custom_call.1}
  #allocation0 [shape = 'u32[]', space=smem, size = 0x4, offset = 0x4, fixed_abs, tag = 'smem constant byte address 0x4 - core index']
  #allocation1 [shape = 'u32[144,128]{1,0:T(1,128)}', space=vmem, size = 0x12000, scoped, tag = 'internal scratch']
  #allocation2 [shape = 'f32[2,128]{1,0:T(2,128)}', space=vmem, size = 0x400, scoped, tag = 'scratch operand']
  %s0 = inlined_call_operand.hbm [shape: f32[2,8,32], index: 0, kind: input, shape index: {}]
  %s1 = inlined_call_operand.hbm [shape: bf16[32,128], index: 1, kind: input, shape index: {}]
  %s2 = inlined_call_operand.vmem [shape: f32[1,128], index: 2, kind: input, shape index: {}]
  %s3 = inlined_call_operand.hbm [shape: f32[128,128], index: 3, kind: input, shape index: {}]
  %s4 = inlined_call_operand.vmem [shape: f32[1,128], index: 4, kind: input, shape index: {}]
  %s5 = inlined_call_operand.hbm [shape: f32[2,128], index: 5, kind: output, shape index: {}]
  %s6 = sld [smem:[#allocation0]]
  $region50: #{tpu_custom_call.1} parent=0
    _
  %s8 = ssub.s32 1, %s6
  %s9 = scalar_select 0, %s8, %s6
  $region1: #{tpu_custom_call.1} parent=0
    #allocation3 [shape = 'u8[8192]{0}', space=vmem, size = 0x2000, scoped, tag = 'input window, operand 0, single buffered']
    #allocation4 [shape = 's32[1]{0}', space=sflag, size = 0x4, scoped, tag = 'scoped memory for tpu_custom_call.1']
    #allocation5 [shape = 's32[1]{0}', space=sflag, size = 0x4, scoped, tag = 'scoped memory for tpu_custom_call.1']
    #allocation6 [shape = 'u8[8192]{0}', space=vmem, size = 0x2000, scoped, tag = 'input window, operand 1, single buffered']
    #allocation7 [shape = 's32[1]{0}', space=sflag, size = 0x4, scoped, tag = 'scoped memory for tpu_custom_call.1']
    #allocation8 [shape = 'u8[65536]{0}', space=vmem, size = 0x10000, scoped, tag = 'input window, operand 3, single buffered']
    #allocation9 [shape = 'u8[1024]{0}', space=vmem, size = 0x400, scoped, tag = 'output window, operand 0, single buffered']
    %10 = vsyncpa [#allocation4], 0
    %11 = vsyncpa [#allocation7], 0
    %12 = vsyncpa [#allocation5], 0
    // Predicated region
    $region2: #{tpu_custom_call.1} parent=1 // pred_check
      _
    $region3: #{tpu_custom_call.1} parent=1 // pred_check_branch
      %14 = sbr.rel (0) target = $region5
    $region4: #{tpu_custom_call.1} parent=1 // pred_region
      %s16 = ssub.s32 256, 256
      %17 = vsyncadd [#allocation4], %s16
      %s18 = sshll.u32 [#allocation3], 4
      %s19 = int_to_ptr.vmem [resolvable:$true] %s18
      %24 = dma.hbm_to_vmem [thread:$0]  %s0, 256, %s19, [#allocation4], 128, 128, 8
    $region5: #{tpu_custom_call.1} parent=1 // pred_fallthru
      _
    // Predicated region
    $region6: #{tpu_custom_call.1} parent=1 // pred_check
      _
    $region7: #{tpu_custom_call.1} parent=1 // pred_check_branch
      %26 = sbr.rel (0) target = $region9
    $region8: #{tpu_custom_call.1} parent=1 // pred_region
      %s28 = ssub.s32 256, 256
      %29 = vsyncadd [#allocation7], %s28
      %s30 = sshll.u32 [#allocation6], 4
      %s31 = int_to_ptr.vmem [resolvable:$true] %s30
      %36 = dma.hbm_to_vmem [thread:$0]  %s1, 256, %s31, [#allocation7], 64, 64, 4
    $region9: #{tpu_custom_call.1} parent=1 // pred_fallthru
      _
    // Predicated region
    $region10: #{tpu_custom_call.1} parent=1 // pred_check
      _
    $region11: #{tpu_custom_call.1} parent=1 // pred_check_branch
      %38 = sbr.rel (0) target = $region13
    $region12: #{tpu_custom_call.1} parent=1 // pred_region
      _
    $region13: #{tpu_custom_call.1} parent=1 // pred_fallthru
      _
    // Predicated region
    $region14: #{tpu_custom_call.1} parent=1 // pred_check
      _
    $region15: #{tpu_custom_call.1} parent=1 // pred_check_branch
      %40 = sbr.rel (0) target = $region17
    $region16: #{tpu_custom_call.1} parent=1 // pred_region
      %s42 = ssub.s32 2048, 2048
      %43 = vsyncadd [#allocation7], %s42
      %s44 = sshll.u32 [#allocation8], 4
      %s45 = int_to_ptr.vmem [resolvable:$true] %s44
      %50 = dma.hbm_to_vmem [thread:$0]  %s3, 2048, %s45, [#allocation7], 128, 128, 8
    $region17: #{tpu_custom_call.1} parent=1 // pred_fallthru
      _
    // Predicated region
    $region18: #{tpu_custom_call.1} parent=1 // pred_check
      _
    $region19: #{tpu_custom_call.1} parent=1 // pred_check_branch
      %52 = sbr.rel (0) target = $region21
    $region20: #{tpu_custom_call.1} parent=1 // pred_region
      _
    $region21: #{tpu_custom_call.1} parent=1 // pred_fallthru
      _
    // Predicated region
    $region22: #{tpu_custom_call.1} parent=1 // pred_check
      _
    $region23: #{tpu_custom_call.1} parent=1 // pred_check_branch
      %54 = sbr.rel (0) target = $region25
    $region24: #{tpu_custom_call.1} parent=1 // pred_region
      %55 = dma.done [#allocation4], 256
    $region25: #{tpu_custom_call.1} parent=1 // pred_fallthru
      _
    // Predicated region
    $region26: #{tpu_custom_call.1} parent=1 // pred_check
      _
    $region27: #{tpu_custom_call.1} parent=1 // pred_check_branch
      %57 = sbr.rel (0) target = $region29
    $region28: #{tpu_custom_call.1} parent=1 // pred_region
      %58 = dma.done [#allocation7], 256
    $region29: #{tpu_custom_call.1} parent=1 // pred_fallthru
      _
    // Predicated region
    $region30: #{tpu_custom_call.1} parent=1 // pred_check
      _
    $region31: #{tpu_custom_call.1} parent=1 // pred_check_branch
      %60 = sbr.rel (0) target = $region33
    $region32: #{tpu_custom_call.1} parent=1 // pred_region
      %61 = dma.done [#allocation7], 2048
    $region33: #{tpu_custom_call.1} parent=1 // pred_fallthru
      _
    %p63 = scmp.eq.s32.totalorder 0, 0
    // Predicated region
    $region34: #{tpu_custom_call.1} parent=1 // pred_check
      %p64 = pneg %p63
    $region35: #{tpu_custom_call.1} parent=1 // pred_check_branch
      %66 = sbr.rel (%p64) target = $region37
    $region36: #{tpu_custom_call.1} parent=1 // pred_region
      %67 = vst [vmem:[#allocation2] sm:$0x3] 0.0
    $region37: #{tpu_custom_call.1} parent=1 // pred_fallthru
      _
    %v68 = vld [vmem:[#allocation3] sm:$0xff]
    %v69 = vld [vmem:[#allocation3 + $0x8] sm:$0xff]
    %v70 = vpack.c.bf16 %v69, %v68
    %v71 = vld [vmem:[#allocation6] sm:$0xf]
    %v72 = vld [vmem:[#allocation6 + $0x4] sm:$0xf]
    %v73 = vld [vmem:[#allocation6 + $0x8] sm:$0xf]
    %v74 = vld [vmem:[#allocation6 + $0xc] sm:$0xf]
    %v75 = vld [vmem:[%s2] sm:$0x1]
    %v77 = vlaneseq
    %v78 = vshrl.u32 %v77, 7
    %v79 = vsub.s32 0, %v78
    %v80 = vrot.slane %v75, %v79
    %v86 = vunpack.c.l.b16 %v71
    %v87 = vunpack.c.l.b16 %v72
    %v88 = vunpack.c.l.b16 %v73
    %v89 = vunpack.c.l.b16 %v74
    %v90 = vpack.c.b16 %v87, %v86
    %v91 = vpack.c.b16 %v89, %v88
    %vm94 = vcmask 261120
    %v96 = vsel %vm94, %v70, 0
    %98 = vmatprep.subr.bf16.mxu0 0
    %99 = vmatpush1.bf16.msra.mxu0 %v90
    %100 = vmatprep.subr.bf16.mxu0 0
    %101 = vmatpush1.bf16.msra.mxu0 %v91
    %102 = vmatprep.subr.bf16.mxu0 0
    %103 = vmatpush1.bf16.msra.mxu0 0
    %104 = vmatprep.subr.bf16.mxu0 0
    %105 = vmatpush1.bf16.msra.mxu0 0
    %106 = vmatprep.subr.bf16.mxu0 0
    %107 = vmatpush1.bf16.msra.mxu0 0
    %108 = vmatprep.subr.bf16.mxu0 0
    %109 = vmatpush1.bf16.msra.mxu0 0
    %110 = vmatprep.subr.bf16.mxu0 0
    %111 = vmatpush1.bf16.msra.mxu0 0
    %112 = vmatprep.subr.bf16.mxu0 0
    %113 = vmatpush1.bf16.msra.mxu0 0
    %114 = vmatprep.subr.bf16.mxu0 0
    %115 = vmatpush1.bf16.msra.mxu0 0
    %116 = vmatprep.subr.bf16.mxu0 0
    %117 = vmatpush1.bf16.msra.mxu0 0
    %118 = vmatprep.subr.bf16.mxu0 0
    %119 = vmatpush1.bf16.msra.mxu0 0
    %120 = vmatprep.subr.bf16.mxu0 0
    %121 = vmatpush1.bf16.msra.mxu0 0
    %122 = vmatprep.subr.bf16.mxu0 0
    %123 = vmatpush1.bf16.msra.mxu0 0
    %124 = vmatprep.subr.bf16.mxu0 0
    %125 = vmatpush1.bf16.msra.mxu0 0
    %126 = vmatprep.subr.bf16.mxu0 0
    %127 = vmatpush1.bf16.msra.mxu0 0
    %128 = vmatprep.subr.bf16.mxu0 0
    %129 = vmatpush1.bf16.msra.mxu0 0
    %130 = vmatprep.mubr.bf16.mxu0 0
    %131 = vmatmul.mubr.bf16.gmra.mrb[0].mxu0 %v96
    %v132 = vpop.f32.mrb[0].mxu0
    %v133 = vadd.f32 %v80, %v132
    %v134 = vpop.f32.mrb[0].mxu0
    %v135 = vpop.f32.mrb[0].mxu0
    %v136 = vadd.f32 %v80, %v135
    %v137 = vpop.f32.mrb[0].mxu0
    %138 = vdwg.mxu0
    %v139 = vtanh.pop %v133
    %v140 = vtanh.pop %v136
    %v141 = vld [vmem:[#allocation2] sm:$0x3]
    %v142 = vrot.slane %v139, 4
    %v143 = vadd.f32 %v139, %v142
    %v144 = vrot.slane %v143, 2
    %v145 = vadd.f32 %v143, %v144
    %v146 = vrot.slane %v145, 1
    %v147 = vadd.f32 %v145, %v146
    %v148 = vrot.slane %v140, 4
    %v149 = vadd.f32 %v140, %v148
    %v150 = vrot.slane %v149, 2
    %v151 = vadd.f32 %v149, %v150
    %v152 = vrot.slane %v151, 1
    %v153 = vadd.f32 %v151, %v152
    %vm156 = vcmask 1041409
    %v157 = vsel %vm156, %v153, %v147
    %v159 = vadd.f32 %v141, %v157
    %160 = vst [vmem:[#allocation2] sm:$0x3] %v159
    // Predicated region
    $region38: #{tpu_custom_call.1} parent=1 // pred_check
      %p161 = pneg %p63
    $region39: #{tpu_custom_call.1} parent=1 // pred_check_branch
      %163 = sbr.rel (%p161) target = $region41
    $region40: #{tpu_custom_call.1} parent=1 // pred_region
      %v164 = vld [vmem:[#allocation2] sm:$0x3]
      %v165 = vld [vmem:[#allocation8] sm:$0xff]
      %v166 = vld [vmem:[#allocation8 + $0x8] sm:$0xff]
      %v167 = vld [vmem:[#allocation8 + $0x10] sm:$0xff]
      %v168 = vld [vmem:[#allocation8 + $0x18] sm:$0xff]
      %v169 = vld [vmem:[#allocation8 + $0x20] sm:$0xff]
      %v170 = vld [vmem:[#allocation8 + $0x28] sm:$0xff]
      %v171 = vld [vmem:[#allocation8 + $0x30] sm:$0xff]
      %v172 = vld [vmem:[#allocation8 + $0x38] sm:$0xff]
      %v173 = vld [vmem:[#allocation8 + $0x40] sm:$0xff]
      %v174 = vld [vmem:[#allocation8 + $0x48] sm:$0xff]
      %v175 = vld [vmem:[#allocation8 + $0x50] sm:$0xff]
      %v176 = vld [vmem:[#allocation8 + $0x58] sm:$0xff]
      %v177 = vld [vmem:[#allocation8 + $0x60] sm:$0xff]
      %v178 = vld [vmem:[#allocation8 + $0x68] sm:$0xff]
      %v179 = vld [vmem:[#allocation8 + $0x70] sm:$0xff]
      %v180 = vld [vmem:[#allocation8 + $0x78] sm:$0xff]
      %v181 = vld [vmem:[%s4] sm:$0x1]
      %v183 = vlaneseq
      %v184 = vshrl.u32 %v183, 7
      %v185 = vsub.s32 0, %v184
      %v186 = vrot.slane %v181, %v185
      %188 = vmatprep.subr.mxu0 0.0
      %189 = vmatpush1.msra.mxu0 %v165
      %190 = vmatprep.subr.mxu0 0.0
      %191 = vmatpush1.msra.mxu0 %v166
      %192 = vmatprep.subr.mxu0 0.0
      %193 = vmatpush1.msra.mxu0 %v167
      %194 = vmatprep.subr.mxu0 0.0
      %195 = vmatpush1.msra.mxu0 %v168
      %196 = vmatprep.subr.mxu0 0.0
      %197 = vmatpush1.msra.mxu0 %v169
      %198 = vmatprep.subr.mxu0 0.0
      %199 = vmatpush1.msra.mxu0 %v170
      %200 = vmatprep.subr.mxu0 0.0
      %201 = vmatpush1.msra.mxu0 %v171
      %202 = vmatprep.subr.mxu0 0.0
      %203 = vmatpush1.msra.mxu0 %v172
      %204 = vmatprep.subr.mxu0 0.0
      %205 = vmatpush1.msra.mxu0 %v173
      %206 = vmatprep.subr.mxu0 0.0
      %207 = vmatpush1.msra.mxu0 %v174
      %208 = vmatprep.subr.mxu0 0.0
      %209 = vmatpush1.msra.mxu0 %v175
      %210 = vmatprep.subr.mxu0 0.0
      %211 = vmatpush1.msra.mxu0 %v176
      %212 = vmatprep.subr.mxu0 0.0
      %213 = vmatpush1.msra.mxu0 %v177
      %214 = vmatprep.subr.mxu0 0.0
      %215 = vmatpush1.msra.mxu0 %v178
      %216 = vmatprep.subr.mxu0 0.0
      %217 = vmatpush1.msra.mxu0 %v179
      %218 = vmatprep.subr.mxu0 0.0
      %219 = vmatpush1.msra.mxu0 %v180
      %220 = vmatprep.subr.mxu0 0.0
      %221 = vmatpush1.msra.mxu0 0.0
      %222 = vmatprep.subr.mxu0 0.0
      %223 = vmatpush1.msra.mxu0 0.0
      %224 = vmatprep.subr.mxu0 0.0
      %225 = vmatpush1.msra.mxu0 0.0
      %226 = vmatprep.subr.mxu0 0.0
      %227 = vmatpush1.msra.mxu0 0.0
      %228 = vmatprep.subr.mxu0 0.0
      %229 = vmatpush1.msra.mxu0 0.0
      %230 = vmatprep.subr.mxu0 0.0
      %231 = vmatpush1.msra.mxu0 0.0
      %232 = vmatprep.subr.mxu0 0.0
      %233 = vmatpush1.msra.mxu0 0.0
      %234 = vmatprep.subr.mxu0 0.0
      %235 = vmatpush1.msra.mxu0 0.0
      %236 = vmatprep.subr.mxu0 0.0
      %237 = vmatpush1.msra.mxu0 0.0
      %238 = vmatprep.subr.mxu0 0.0
      %239 = vmatpush1.msra.mxu0 0.0
      %240 = vmatprep.subr.mxu0 0.0
      %241 = vmatpush1.msra.mxu0 0.0
      %242 = vmatprep.subr.mxu0 0.0
      %243 = vmatpush1.msra.mxu0 0.0
      %244 = vmatprep.subr.mxu0 0.0
      %245 = vmatpush1.msra.mxu0 0.0
      %246 = vmatprep.subr.mxu0 0.0
      %247 = vmatpush1.msra.mxu0 0.0
      %248 = vmatprep.subr.mxu0 0.0
      %249 = vmatpush1.msra.mxu0 0.0
      %250 = vmatprep.subr.mxu0 0.0
      %251 = vmatpush1.msra.mxu0 0.0
      %252 = vmatprep.mubr.f32.mxu0 0.0
      %253 = vmatmul.mubr.f32.gmra.mrb[0].mxu0 %v164
      %v254 = vpop.f32.mrb[0].mxu0
      %v255 = vadd.f32 %v186, %v254
      %v256 = vpop.f32.mrb[0].mxu0
      %257 = vdwg.mxu0
      %258 = vst [vmem:[#allocation9] sm:$0x3] %v255
    $region41: #{tpu_custom_call.1} parent=1 // pred_fallthru
      _
    // Predicated region
    $region42: #{tpu_custom_call.1} parent=1 // pred_check
      _
    $region43: #{tpu_custom_call.1} parent=1 // pred_check_branch
      %260 = sbr.rel (0) target = $region45
    $region44: #{tpu_custom_call.1} parent=1 // pred_region
      %s262 = ssub.s32 32, 32
      %263 = vsyncadd [#allocation5], %s262
      %s265 = sshll.u32 [#allocation9], 4
      %s266 = int_to_ptr.vmem [resolvable:$true] %s265
      %268 = dma.vmem_to_hbm [thread:$0]  %s266, 32, %s5, [#allocation5]
    $region45: #{tpu_custom_call.1} parent=1 // pred_fallthru
      _
    // Predicated region
    $region46: #{tpu_custom_call.1} parent=1 // pred_check
      _
    $region47: #{tpu_custom_call.1} parent=1 // pred_check_branch
      %270 = sbr.rel (0) target = $region49
    $region48: #{tpu_custom_call.1} parent=1 // pred_region
      %271 = dma.done [#allocation5], 32
    $region49: #{tpu_custom_call.1} parent=1 // pred_fallthru
      _
    %272 = vsyncpa [#allocation4], 1
    %273 = vsyncpa [#allocation7], 1
    %274 = vsyncpa [#allocation5], 1

</llo_original>
